<compile_context>
chip_gen: v7x
topology: tpu7x:2x2x1
jax: 0.10.0
libtpu: 0.0.40
codegen_flags: <defaults>
</compile_context>

<pallas_src>
import functools
import math

import jax
import jax.numpy as jnp
from jax import lax
from jax.experimental import pallas as pl
from jax.experimental.pallas import tpu as pltpu

LOG2 = math.log(2.0)


def _round_up(x, m):
    return ((x + m - 1) // m) * m


def _tpu_generation():
    """Best-effort TPU generation detection for tile / VMEM defaults."""
    try:
        kind = jax.devices()[0].device_kind.lower()
    except Exception:
        return "v6e"
    if "v7" in kind:
        return "v7x"
    if "v6" in kind:
        return "v6e"
    return "v5e"   # v5e / v5p / v4 / older: conservative 128-row-MXU tiling


def _pick_tiles(n_graphs, n_atoms, latent_dim, itemsize, gen,
                tile_g=None, tile_a=None):
    # --- graph tile: fill the MXU M dimension (256 rows on v6e/v7x, 128 on v5e) ---
    tg = tile_g if tile_g is not None else (128 if gen == "v5e" else 256)
    tg = min(tg, _round_up(n_graphs, 8))
    tg = max(8, _round_up(tg, 8))
    # v7x has 2 TensorCores; only the 'parallel' graph axis is sharded across
    # them, so prefer >= 2 graph tiles when the batch allows it.
    if gen == "v7x":
        while _round_up(n_graphs, tg) // tg < 2 and tg > 8:
            tg = max(8, _round_up(tg // 2, 8))
    g_pad = _round_up(n_graphs, tg)

    # --- atom tile: ~1-2 MiB node blocks (amortize ~0.35us per grid step),
    #     capped so the (tg, ta) mask temporaries stay small; v7x VMEM binds. ---
    if tile_a is None:
        node_target = (2 << 20) if gen != "v7x" else (1 << 20)
        mask_cap = (8 << 20) if gen != "v7x" else (4 << 20)
        ta = node_target // max(latent_dim * itemsize, 1)
        ta = min(ta, mask_cap // (tg * 4))
        ta = max(512, min(ta, 8192))
    else:
        ta = tile_a
    ta = min(ta, _round_up(n_atoms, 8))
    ta = max(8, _round_up(ta, 8))
    a_pad = _round_up(n_atoms, ta)
    return tg, g_pad, ta, a_pad


def _energy_head_kernel(num_hidden_layers, blk0_ref, nblk_ref,
                        off_ref, cnt_ref, node_ref, *refs):
    """refs = (w0, b0, ..., w_last(1,h), b_last(1,1), out_ref, acc_ref)."""
    acc_ref = refs[-1]
    out_ref = refs[-2]
    wb_refs = refs[:-2]

    g = pl.program_id(0)                       # graph-tile index ('parallel')
    a = pl.program_id(1)                       # tile-local atom-block index
    n_a = pl.num_programs(1)

    tile_g = off_ref.shape[0]
    tile_a = node_ref.shape[0]

    @pl.when(a == 0)
    def _():
        acc_ref[...] = jnp.zeros_like(acc_ref)

    # Only blocks [0, nblk[g]) carry atoms belonging to this graph tile; steps
    # past that (padding up to the max block count across tiles) are skipped.
    @pl.when(a < nblk_ref[g])
    def _():
        # absolute atom index of the first row of the current node block
        atom0 = (blk0_ref[g] + a) * tile_a
        # lane iota compared against per-graph COLUMN bounds (off - atom0,
        # off + cnt - atom0): no full-plane integer add per step.
        lane = lax.broadcasted_iota(jnp.int32, (tile_g, tile_a), 1)
        lo = off_ref[...] - atom0              # (tile_g, 1) int32
        hi = lo + cnt_ref[...]                 # (tile_g, 1) int32
        in_seg = (lane >= lo) & (lane < hi)

        node = node_ref[...]                   # (tile_a, D); bf16 streams natively
        seg_mask = in_seg.astype(node.dtype)   # 0/1 exact even in bf16
        # segment-SUM on the MXU with f32 accumulation
        acc_ref[...] += jnp.dot(seg_mask, node, preferred_element_type=jnp.float32)

    # --- epilogue: mean scale + MLP, once per graph tile (last atom step) ---
    @pl.when(a == n_a - 1)
    def _():
        cnt_safe = jnp.maximum(cnt_ref[...], 1).astype(jnp.float32)  # empty-graph guard
        inv_cnt = pl.reciprocal(cnt_safe, approx=False)              # (tile_g, 1)
        h = acc_ref[...] * inv_cnt                                   # mean, (tile_g, D)

        n_linear = num_hidden_layers + 1
        for i in range(n_linear - 1):          # hidden layers with ssp activation
            w = wb_refs[2 * i][...]            # (in, out)
            b = wb_refs[2 * i + 1][...]        # (1, out)
            h = jnp.dot(h, w, preferred_element_type=jnp.float32) + b
            h = jax.nn.softplus(h) - LOG2      # shifted softplus

        # final Linear(hidden, 1) as a lane reduction (avoids an N=1 MXU matmul)
        w_out = wb_refs[-2][...]               # (1, hidden_last)
        b_out = wb_refs[-1][...]               # (1, 1)
        out_ref[...] = jnp.sum(h * w_out, axis=-1, keepdims=True) + b_out


def energy_head_forward(node_features, n_node, params, *,
                        tile_a=None, tile_g=None, stream_nodes_in_bf16=False):
    """EnergyHead.forward: returns (n_graphs,) energy predictions.

    node_features: (n_atoms, latent_dim), f32 or bf16
    n_node:        (n_graphs,) int, atoms per graph (contiguous segments)
    params:        list of (w, b); w: (in, out), b: (out,)
    stream_nodes_in_bf16: opt-in cast of f32 node features to bf16 (halves the
        dominant HBM traffic, bf16 MXU path; accumulation stays f32).
    """
    if stream_nodes_in_bf16 and node_features.dtype == jnp.float32:
        node_features = node_features.astype(jnp.bfloat16)

    n_atoms, latent_dim = node_features.shape
    n_graphs = n_node.shape[0]
    n_node = n_node.astype(jnp.int32)
    gen = _tpu_generation()

    tg, g_pad, ta, a_pad = _pick_tiles(
        n_graphs, n_atoms, latent_dim, node_features.dtype.itemsize, gen,
        tile_g=tile_g, tile_a=tile_a)
    n_gtiles = g_pad // tg

    # Per-graph segment start offsets (contiguous blocks).  Padded graphs get
    # offset = n_atoms and count = 0 so they contribute nothing AND keep the
    # per-tile atom ranges tight.
    offsets = jnp.concatenate(
        [jnp.zeros((1,), jnp.int32), jnp.cumsum(n_node)[:-1].astype(jnp.int32)])
    off_p = jnp.pad(offsets, (0, g_pad - n_graphs), constant_values=n_atoms)
    cnt_p = jnp.pad(n_node, (0, g_pad - n_graphs))

    # --- per-graph-tile atom-block ranges (scalar prefetch; drives node DMA) ---
    off2 = off_p.reshape(n_gtiles, tg)
    cnt2 = cnt_p.reshape(n_gtiles, tg)
    tile_start = off2[:, 0]                               # offsets are sorted
    tile_end = jnp.max(off2 + cnt2, axis=1)
    blk0 = (tile_start // ta).astype(jnp.int32)           # first atom block of tile
    blk_end = ((tile_end + ta - 1) // ta).astype(jnp.int32)
    nblk = jnp.maximum(blk_end - blk0, 0).astype(jnp.int32)

    # Atom-block grid extent = max blocks any graph tile touches (static value;
    # requires concrete n_node -- falls back to full streaming under tracing).
    try:
        max_blocks = max(int(jnp.max(nblk)), 1)
    except Exception:
        max_blocks = max(a_pad // ta, 1)

    # zero-padded atom rows fall outside every segment -> mask 0
    node_features = jnp.pad(node_features, ((0, a_pad - n_atoms), (0, 0)))

    # --- flatten MLP parameters; last layer weight pre-transposed to (1, hidden) ---
    n_linear = len(params)
    num_hidden_layers = n_linear - 1
    flat = []
    for i, (w, b) in enumerate(params):
        if i < n_linear - 1:
            flat.append(w.astype(jnp.float32))                    # (in, out)
            flat.append(b.reshape(1, -1).astype(jnp.float32))     # (1, out)
        else:
            flat.append(w.reshape(1, -1).astype(jnp.float32))     # (1, hidden)
            flat.append(b.reshape(1, 1).astype(jnp.float32))      # (1, 1)

    last_blk = a_pad // ta - 1

    def node_map(g, a, blk0_ref, nblk_ref):
        # clamp keeps the DMA in-bounds on steps past this tile's last block;
        # the repeated block index then lets Pallas skip the redundant copy.
        return (jnp.minimum(blk0_ref[g] + a, last_blk), 0)

    def gtile_map(g, a, blk0_ref, nblk_ref):
        return (g, 0)

    def const_map(g, a, blk0_ref, nblk_ref):
        return (0, 0)

    in_specs = [
        pl.BlockSpec((tg, 1), gtile_map),                         # offsets
        pl.BlockSpec((tg, 1), gtile_map),                         # counts
        pl.BlockSpec((ta, latent_dim), node_map),                 # node features
    ] + [pl.BlockSpec(x.shape, const_map) for x in flat]          # weights: resident
    # NOTE: constant-index weight blocks would ideally be single-buffered
    # (pipeline_mode=pl.Buffered(1)); at these sizes the double-buffer VMEM cost
    # is negligible, so the default is kept for lowering robustness.
    out_spec = pl.BlockSpec((tg, 1), gtile_map)
    scratch = [pltpu.VMEM((tg, latent_dim), jnp.float32)]         # f32 segment-sum acc

    # generation-aware scoped-VMEM sizing (v7x: 64 MiB part -> cap at 32 MiB)
    w_bytes = sum(int(x.size) * 4 for x in flat)
    need = (2 * ta * latent_dim * node_features.dtype.itemsize    # double-buffered node blocks
            + 2 * w_bytes                                         # weights / biases
            + tg * latent_dim * 4                                 # accumulator
            + 4 * tg * ta * 4                                     # mask / iota temporaries
            + 16 * tg * 4                                         # off / cnt / out blocks
            + (2 << 20))                                          # headroom
    vmem_cap = (32 << 20) if gen == "v7x" else (64 << 20)
    vmem_limit = int(min(vmem_cap, max(16 << 20, need)))

    out = pl.pallas_call(
        functools.partial(_energy_head_kernel, num_hidden_layers),
        out_shape=jax.ShapeDtypeStruct((g_pad, 1), jnp.float32),
        grid_spec=pltpu.PrefetchScalarGridSpec(
            num_scalar_prefetch=2,
            grid=(n_gtiles, max_blocks),
            in_specs=in_specs,
            out_specs=out_spec,
            scratch_shapes=scratch),
        compiler_params=pltpu.CompilerParams(
            dimension_semantics=("parallel", "arbitrary"),
            vmem_limit_bytes=vmem_limit),
    )(blk0, nblk, off_p.reshape(g_pad, 1), cnt_p.reshape(g_pad, 1),
      node_features, *flat)

    return out[:n_graphs, 0]                                      # squeeze(-1)


def _reference_forward(node_features, n_node, params):
    """Pure-JAX reference for correctness check."""
    seg_ids = jnp.repeat(jnp.arange(n_node.shape[0]), n_node,
                         total_repeat_length=node_features.shape[0])
    summed = jax.ops.segment_sum(node_features.astype(jnp.float32), seg_ids,
                                 num_segments=n_node.shape[0])
    h = summed / n_node[:, None].astype(jnp.float32)
    for i, (w, b) in enumerate(params):
        h = h @ w + b[None, :]
        if i < len(params) - 1:
            h = jax.nn.softplus(h) - LOG2
    return h[:, 0]


if __name__ == "__main__":
    # Small deterministic config consistent with EnergyHead(__init__):
    latent_dim = 32
    mlp_hidden_dim = 32
    num_mlp_layers = 2
    n_graphs = 2
    n_node = jnp.array([3, 5], dtype=jnp.int32)
    n_atoms = int(n_node.sum())

    key = jax.random.PRNGKey(0)
    k_feat, *k_ws = jax.random.split(key, 2 + (num_mlp_layers + 1))

    node_features = jax.random.normal(k_feat, (n_atoms, latent_dim), jnp.float32)

    # Deterministic synthetic MLP parameters (shapes from build_mlp):
    #   Linear(latent, hidden), ssp, Linear(hidden, hidden), ssp, Linear(hidden, 1)
    layer_dims = [latent_dim] + [mlp_hidden_dim] * num_mlp_layers + [1]
    params = []
    for i, (din, dout) in enumerate(zip(layer_dims[:-1], layer_dims[1:])):
        kw, kb = jax.random.split(k_ws[i])
        scale = 1.0 / jnp.sqrt(jnp.float32(din))
        w = jax.random.uniform(kw, (din, dout), jnp.float32, -scale, scale)
        b = jax.random.uniform(kb, (dout,), jnp.float32, -scale, scale)
        params.append((w, b))

    pred = energy_head_forward(node_features, n_node, params)
    pred = jax.block_until_ready(pred)

    ref = _reference_forward(node_features, n_node, params)
    assert pred.shape == (n_graphs,)
    assert jnp.allclose(pred, ref, atol=1e-5, rtol=1e-5), (pred, ref)

    # TODO(synk): ScalarNormalizer / LinearReferenceEnergy denormalization (predict())
    # and loss() are train/inference-wrapper glue, not part of EnergyHead.forward.
    print("KERNEL_OK")
</pallas_src>

<mosaic_0001>
module attributes {stable_mosaic.version = 11 : i64} {
  func.func @_energy_head_kernel(%arg0: i32, %arg1: i32, %arg2: memref<1xi32, #tpu.memory_space<smem>>, %arg3: memref<1xi32, #tpu.memory_space<smem>>, %arg4: memref<8x1xi32, #tpu.memory_space<vmem>>, %arg5: memref<8x1xi32, #tpu.memory_space<vmem>>, %arg6: memref<8x32xf32, #tpu.memory_space<vmem>>, %arg7: memref<32x32xf32, #tpu.memory_space<vmem>>, %arg8: memref<1x32xf32, #tpu.memory_space<vmem>>, %arg9: memref<32x32xf32, #tpu.memory_space<vmem>>, %arg10: memref<1x32xf32, #tpu.memory_space<vmem>>, %arg11: memref<1x32xf32, #tpu.memory_space<vmem>>, %arg12: memref<1x1xf32, #tpu.memory_space<vmem>>, %arg13: memref<8x1xf32, #tpu.memory_space<vmem>>, %arg14: memref<8x32xf32, #tpu.memory_space<vmem>>) attributes {dimension_semantics = [#tpu.dimension_semantics<parallel>, #tpu.dimension_semantics<arbitrary>], iteration_bounds = array<i64: 1, 1>, scalar_prefetch = 2 : i64, scratch_operands = 1 : i64, tpu.core_type = #tpu.core_type<tc>, window_params = [{transform_indices = @transform_0, window_bounds = array<i64: 8, 1>}, {transform_indices = @transform_1, window_bounds = array<i64: 8, 1>}, {transform_indices = @transform_2, window_bounds = array<i64: 8, 32>}, {pipeline_mode = #tpu.pipeline_mode<synchronous>, transform_indices = @transform_3, window_bounds = array<i64: 32, 32>}, {pipeline_mode = #tpu.pipeline_mode<synchronous>, transform_indices = @transform_4, window_bounds = array<i64: 1, 32>}, {pipeline_mode = #tpu.pipeline_mode<synchronous>, transform_indices = @transform_5, window_bounds = array<i64: 32, 32>}, {pipeline_mode = #tpu.pipeline_mode<synchronous>, transform_indices = @transform_6, window_bounds = array<i64: 1, 32>}, {pipeline_mode = #tpu.pipeline_mode<synchronous>, transform_indices = @transform_7, window_bounds = array<i64: 1, 32>}, {pipeline_mode = #tpu.pipeline_mode<synchronous>, transform_indices = @transform_8, window_bounds = array<i64: 1, 1>}, {transform_indices = @transform_9, window_bounds = array<i64: 8, 1>}]} {
    %c0_i32 = arith.constant 0 : i32
    %0 = arith.cmpi eq, %arg1, %c0_i32 : i32
    %1 = arith.extui %0 : i1 to i32
    %c0_i32_0 = arith.constant 0 : i32
    %2 = arith.cmpi ne, %1, %c0_i32_0 : i32
    scf.if %2 {
      %cst = arith.constant 0.000000e+00 : f32
      %11 = vector.broadcast %cst : f32 to vector<8x32xf32>
      %c0 = arith.constant 0 : index
      %c0_4 = arith.constant 0 : index
      %12 = vector.load %arg14[%c0, %c0_4] : memref<8x32xf32, #tpu.memory_space<vmem>>, vector<8x32xf32>
      tpu.vector_store %arg14[%c0, %c0_4], %11 {strides = array<i32>} : memref<8x32xf32, #tpu.memory_space<vmem>>, vector<8x32xf32>,
    } else {
    }
    %3 = arith.index_cast %arg0 : i32 to index
    %4 = memref.load %arg3[%3] : memref<1xi32, #tpu.memory_space<smem>>
    %5 = arith.cmpi slt, %arg1, %4 : i32
    %6 = arith.extui %5 : i1 to i32
    %c0_i32_1 = arith.constant 0 : i32
    %7 = arith.cmpi ne, %6, %c0_i32_1 : i32
    scf.if %7 {
      %11 = arith.index_cast %arg0 : i32 to index
      %12 = memref.load %arg2[%11] : memref<1xi32, #tpu.memory_space<smem>>
      %13 = arith.addi %12, %arg1 : i32
      %c8_i32 = arith.constant 8 : i32
      %14 = arith.muli %13, %c8_i32 : i32
      %15 = tpu.iota {dimensions = array<i32: 1>} : vector<8x8xi32>
      %c0 = arith.constant 0 : index
      %c0_4 = arith.constant 0 : index
      %16 = vector.load %arg4[%c0, %c0_4] : memref<8x1xi32, #tpu.memory_space<vmem>>, vector<8x1xi32>
      %17 = vector.broadcast %14 : i32 to vector<8x1xi32>
      %18 = arith.subi %16, %17 : vector<8x1xi32>
      %c0_5 = arith.constant 0 : index
      %c0_6 = arith.constant 0 : index
      %19 = vector.load %arg5[%c0_5, %c0_6] : memref<8x1xi32, #tpu.memory_space<vmem>>, vector<8x1xi32>
      %20 = arith.addi %18, %19 : vector<8x1xi32>
      %21 = vector.broadcast %18 : vector<8x1xi32> to vector<8x8xi32>
      %22 = arith.cmpi sge, %15, %21 : vector<8x8xi32>
      %23 = vector.broadcast %20 : vector<8x1xi32> to vector<8x8xi32>
      %24 = arith.cmpi slt, %15, %23 : vector<8x8xi32>
      %25 = arith.andi %22, %24 : vector<8x8xi1>
      %c0_7 = arith.constant 0 : index
      %c0_8 = arith.constant 0 : index
      %26 = vector.load %arg6[%c0_7, %c0_8] : memref<8x32xf32, #tpu.memory_space<vmem>>, vector<8x32xf32>
      %27 = arith.extui %25 : vector<8x8xi1> to vector<8x8xi32>
      %28 = arith.sitofp %27 : vector<8x8xi32> to vector<8x8xf32>
      %c0_9 = arith.constant 0 : index
      %c0_10 = arith.constant 0 : index
      %29 = vector.load %arg14[%c0_9, %c0_10] : memref<8x32xf32, #tpu.memory_space<vmem>>, vector<8x32xf32>
      %cst = arith.constant dense<0.000000e+00> : vector<8x32xf32>
      %30 = tpu.matmul %28, %26, %cst {dimension_numbers = #tpu.dot_dimension_numbers<[1], [0], [0], [1], [0, 0, 1, 1], [], []>} : vector<8x8xf32>, vector<8x32xf32>, vector<8x32xf32> -> vector<8x32xf32>
      %31 = arith.addf %29, %30 : vector<8x32xf32>
      %c0_11 = arith.constant 0 : index
      %c0_12 = arith.constant 0 : index
      %32 = vector.load %arg14[%c0_11, %c0_12] : memref<8x32xf32, #tpu.memory_space<vmem>>, vector<8x32xf32>
      tpu.vector_store %arg14[%c0_11, %c0_12], %31 {strides = array<i32>} : memref<8x32xf32, #tpu.memory_space<vmem>>, vector<8x32xf32>,
    } else {
    }
    %c0_i32_2 = arith.constant 0 : i32
    %8 = arith.cmpi eq, %arg1, %c0_i32_2 : i32
    %9 = arith.extui %8 : i1 to i32
    %c0_i32_3 = arith.constant 0 : i32
    %10 = arith.cmpi ne, %9, %c0_i32_3 : i32
    scf.if %10 {
      %c0 = arith.constant 0 : index
      %c0_4 = arith.constant 0 : index
      %11 = vector.load %arg5[%c0, %c0_4] : memref<8x1xi32, #tpu.memory_space<vmem>>, vector<8x1xi32>
      %c1_i32 = arith.constant 1 : i32
      %12 = vector.broadcast %c1_i32 : i32 to vector<8x1xi32>
      %13 = arith.maxsi %11, %12 : vector<8x1xi32>
      %14 = arith.sitofp %13 : vector<8x1xi32> to vector<8x1xf32>
      %15 = tpu.reciprocal %14 : vector<8x1xf32> -> vector<8x1xf32>
      %c0_5 = arith.constant 0 : index
      %c0_6 = arith.constant 0 : index
      %16 = vector.load %arg14[%c0_5, %c0_6] : memref<8x32xf32, #tpu.memory_space<vmem>>, vector<8x32xf32>
      %17 = vector.broadcast %15 : vector<8x1xf32> to vector<8x32xf32>
      %18 = arith.mulf %16, %17 : vector<8x32xf32>
      %c0_7 = arith.constant 0 : index
      %c0_8 = arith.constant 0 : index
      %19 = vector.load %arg7[%c0_7, %c0_8] : memref<32x32xf32, #tpu.memory_space<vmem>>, vector<32x32xf32>
      %c0_9 = arith.constant 0 : index
      %c0_10 = arith.constant 0 : index
      %20 = vector.load %arg8[%c0_9, %c0_10] : memref<1x32xf32, #tpu.memory_space<vmem>>, vector<1x32xf32>
      %cst = arith.constant dense<0.000000e+00> : vector<8x32xf32>
      %21 = tpu.matmul %18, %19, %cst {dimension_numbers = #tpu.dot_dimension_numbers<[1], [0], [0], [1], [0, 0, 1, 1], [], []>} : vector<8x32xf32>, vector<32x32xf32>, vector<8x32xf32> -> vector<8x32xf32>
      %22 = vector.broadcast %20 : vector<1x32xf32> to vector<8x32xf32>
      %23 = arith.addf %21, %22 : vector<8x32xf32>
      %cst_11 = arith.constant 0.000000e+00 : f32
      %24 = vector.broadcast %cst_11 : f32 to vector<8x32xf32>
      %25 = arith.maximumf %23, %24 : vector<8x32xf32>
      %26 = vector.broadcast %cst_11 : f32 to vector<8x32xf32>
      %27 = arith.subf %23, %26 : vector<8x32xf32>
      %28 = arith.cmpf one, %27, %27 : vector<8x32xf32>
      %29 = vector.broadcast %cst_11 : f32 to vector<8x32xf32>
      %30 = arith.addf %23, %29 : vector<8x32xf32>
      %31 = math.absf %27 : vector<8x32xf32>
      %cst_12 = arith.constant 0.000000e+00 : f32
      %32 = vector.broadcast %cst_12 : f32 to vector<8x32xf32>
      %33 = arith.subf %32, %31 : vector<8x32xf32>
      %34 = math.exp %33 : vector<8x32xf32>
      %35 = math.log1p %34 : vector<8x32xf32>
      %36 = arith.addf %25, %35 : vector<8x32xf32>
      %37 = arith.select %28, %30, %36 : vector<8x32xi1>, vector<8x32xf32>
      %cst_13 = arith.constant 0.693147182 : f32
      %38 = vector.broadcast %cst_13 : f32 to vector<8x32xf32>
      %39 = arith.subf %37, %38 : vector<8x32xf32>
      %c0_14 = arith.constant 0 : index
      %c0_15 = arith.constant 0 : index
      %40 = vector.load %arg9[%c0_14, %c0_15] : memref<32x32xf32, #tpu.memory_space<vmem>>, vector<32x32xf32>
      %c0_16 = arith.constant 0 : index
      %c0_17 = arith.constant 0 : index
      %41 = vector.load %arg10[%c0_16, %c0_17] : memref<1x32xf32, #tpu.memory_space<vmem>>, vector<1x32xf32>
      %cst_18 = arith.constant dense<0.000000e+00> : vector<8x32xf32>
      %42 = tpu.matmul %39, %40, %cst_18 {dimension_numbers = #tpu.dot_dimension_numbers<[1], [0], [0], [1], [0, 0, 1, 1], [], []>} : vector<8x32xf32>, vector<32x32xf32>, vector<8x32xf32> -> vector<8x32xf32>
      %43 = vector.broadcast %41 : vector<1x32xf32> to vector<8x32xf32>
      %44 = arith.addf %42, %43 : vector<8x32xf32>
      %cst_19 = arith.constant 0.000000e+00 : f32
      %45 = vector.broadcast %cst_19 : f32 to vector<8x32xf32>
      %46 = arith.maximumf %44, %45 : vector<8x32xf32>
      %47 = vector.broadcast %cst_19 : f32 to vector<8x32xf32>
      %48 = arith.subf %44, %47 : vector<8x32xf32>
      %49 = arith.cmpf one, %48, %48 : vector<8x32xf32>
      %50 = vector.broadcast %cst_19 : f32 to vector<8x32xf32>
      %51 = arith.addf %44, %50 : vector<8x32xf32>
      %52 = math.absf %48 : vector<8x32xf32>
      %cst_20 = arith.constant 0.000000e+00 : f32
      %53 = vector.broadcast %cst_20 : f32 to vector<8x32xf32>
      %54 = arith.subf %53, %52 : vector<8x32xf32>
      %55 = math.exp %54 : vector<8x32xf32>
      %56 = math.log1p %55 : vector<8x32xf32>
      %57 = arith.addf %46, %56 : vector<8x32xf32>
      %58 = arith.select %49, %51, %57 : vector<8x32xi1>, vector<8x32xf32>
      %cst_21 = arith.constant 0.693147182 : f32
      %59 = vector.broadcast %cst_21 : f32 to vector<8x32xf32>
      %60 = arith.subf %58, %59 : vector<8x32xf32>
      %c0_22 = arith.constant 0 : index
      %c0_23 = arith.constant 0 : index
      %61 = vector.load %arg11[%c0_22, %c0_23] : memref<1x32xf32, #tpu.memory_space<vmem>>, vector<1x32xf32>
      %c0_24 = arith.constant 0 : index
      %c0_25 = arith.constant 0 : index
      %62 = vector.load %arg12[%c0_24, %c0_25] : memref<1x1xf32, #tpu.memory_space<vmem>>, vector<1x1xf32>
      %63 = vector.broadcast %61 : vector<1x32xf32> to vector<8x32xf32>
      %64 = arith.mulf %60, %63 : vector<8x32xf32>
      %cst_26 = arith.constant dense<0.000000e+00> : vector<8xf32>
      %65 = vector.multi_reduction <add>, %64, %cst_26 [1] : vector<8x32xf32> to vector<8xf32>
      %66 = vector.shape_cast %65 : vector<8xf32> to vector<8x1xf32>
      %67 = vector.broadcast %62 : vector<1x1xf32> to vector<8x1xf32>
      %68 = arith.addf %66, %67 : vector<8x1xf32>
      %c0_27 = arith.constant 0 : index
      %c0_28 = arith.constant 0 : index
      %69 = vector.load %arg13[%c0_27, %c0_28] : memref<8x1xf32, #tpu.memory_space<vmem>>, vector<8x1xf32>
      tpu.vector_store %arg13[%c0_27, %c0_28], %68 {strides = array<i32>} : memref<8x1xf32, #tpu.memory_space<vmem>>, vector<8x1xf32>,
    } else {
    }
    return
  }
  func.func @transform_0(%arg0: i32, %arg1: i32, %arg2: memref<1xi32, #tpu.memory_space<smem>>, %arg3: memref<1xi32, #tpu.memory_space<smem>>) -> (i32, i32) {
    %c0_i32 = arith.constant 0 : i32
    %c0_i32_0 = arith.constant 0 : i32
    return %arg0, %c0_i32 : i32, i32
  }
  func.func @transform_1(%arg0: i32, %arg1: i32, %arg2: memref<1xi32, #tpu.memory_space<smem>>, %arg3: memref<1xi32, #tpu.memory_space<smem>>) -> (i32, i32) {
    %c0_i32 = arith.constant 0 : i32
    %c0_i32_0 = arith.constant 0 : i32
    return %arg0, %c0_i32 : i32, i32
  }
  func.func @transform_2(%arg0: i32, %arg1: i32, %arg2: memref<1xi32, #tpu.memory_space<smem>>, %arg3: memref<1xi32, #tpu.memory_space<smem>>) -> (i32, i32) {
    %0 = arith.index_cast %arg0 : i32 to index
    %1 = memref.load %arg2[%0] : memref<1xi32, #tpu.memory_space<smem>>
    %2 = arith.addi %1, %arg1 : i32
    %c0_i32 = arith.constant 0 : i32
    %3 = arith.minsi %2, %c0_i32 : i32
    %c0_i32_0 = arith.constant 0 : i32
    %c0_i32_1 = arith.constant 0 : i32
    return %3, %c0_i32_0 : i32, i32
  }
  func.func @transform_3(%arg0: i32, %arg1: i32, %arg2: memref<1xi32, #tpu.memory_space<smem>>, %arg3: memref<1xi32, #tpu.memory_space<smem>>) -> (i32, i32) {
    %c0_i32 = arith.constant 0 : i32
    %c0_i32_0 = arith.constant 0 : i32
    %c0_i32_1 = arith.constant 0 : i32
    return %c0_i32, %c0_i32_0 : i32, i32
  }
  func.func @transform_4(%arg0: i32, %arg1: i32, %arg2: memref<1xi32, #tpu.memory_space<smem>>, %arg3: memref<1xi32, #tpu.memory_space<smem>>) -> (i32, i32) {
    %c0_i32 = arith.constant 0 : i32
    %c0_i32_0 = arith.constant 0 : i32
    %c0_i32_1 = arith.constant 0 : i32
    return %c0_i32, %c0_i32_0 : i32, i32
  }
  func.func @transform_5(%arg0: i32, %arg1: i32, %arg2: memref<1xi32, #tpu.memory_space<smem>>, %arg3: memref<1xi32, #tpu.memory_space<smem>>) -> (i32, i32) {
    %c0_i32 = arith.constant 0 : i32
    %c0_i32_0 = arith.constant 0 : i32
    %c0_i32_1 = arith.constant 0 : i32
    return %c0_i32, %c0_i32_0 : i32, i32
  }
  func.func @transform_6(%arg0: i32, %arg1: i32, %arg2: memref<1xi32, #tpu.memory_space<smem>>, %arg3: memref<1xi32, #tpu.memory_space<smem>>) -> (i32, i32) {
    %c0_i32 = arith.constant 0 : i32
    %c0_i32_0 = arith.constant 0 : i32
    %c0_i32_1 = arith.constant 0 : i32
    return %c0_i32, %c0_i32_0 : i32, i32
  }
  func.func @transform_7(%arg0: i32, %arg1: i32, %arg2: memref<1xi32, #tpu.memory_space<smem>>, %arg3: memref<1xi32, #tpu.memory_space<smem>>) -> (i32, i32) {
    %c0_i32 = arith.constant 0 : i32
    %c0_i32_0 = arith.constant 0 : i32
    %c0_i32_1 = arith.constant 0 : i32
    return %c0_i32, %c0_i32_0 : i32, i32
  }
  func.func @transform_8(%arg0: i32, %arg1: i32, %arg2: memref<1xi32, #tpu.memory_space<smem>>, %arg3: memref<1xi32, #tpu.memory_space<smem>>) -> (i32, i32) {
    %c0_i32 = arith.constant 0 : i32
    %c0_i32_0 = arith.constant 0 : i32
    %c0_i32_1 = arith.constant 0 : i32
    return %c0_i32, %c0_i32_0 : i32, i32
  }
  func.func @transform_9(%arg0: i32, %arg1: i32, %arg2: memref<1xi32, #tpu.memory_space<smem>>, %arg3: memref<1xi32, #tpu.memory_space<smem>>) -> (i32, i32) {
    %c0_i32 = arith.constant 0 : i32
    %c0_i32_0 = arith.constant 0 : i32
    return %arg0, %c0_i32 : i32, i32
  }
}

</mosaic_0001>

<llo_original>
// kernel: tpu_custom_call.1
$region0: #{tpu_custom_call.1}
  #allocation0 [shape = 'u32[]', space=smem, size = 0x4, offset = 0x4, fixed_abs, tag = 'smem constant byte address 0x4 - core index']
  #allocation1 [shape = 'u32[144,128]{1,0:T(1,128)}', space=vmem, size = 0x12000, scoped, tag = 'internal scratch']
  #allocation2 [shape = 'f32[8,32]{1,0:T(8,128)}', space=vmem, size = 0x1000, scoped, tag = 'scratch operand']
  #allocation3 [shape = 's32[1]{0}', space=sflag, size = 0x4, scoped, tag = 'scoped memory for tpu_custom_call.1']
  #allocation4 [shape = 's32[1]{0:T(128)S(6)}', space=smem, size = 0x200, scoped, tag = 'prefetched SMEM operand 0']
  #allocation5 [shape = 's32[1]{0:T(128)S(6)}', space=smem, size = 0x200, scoped, tag = 'prefetched SMEM operand 1']
  #allocation6 [shape = 'f32[1,1]{1,0:T(1,128)S(1)}', space=vmem, size = 0x200, scoped, tag = 'scoped memory for tpu_custom_call.1']
  %s0 = inlined_call_operand.<no memory space> [shape: s32[1], index: 0, kind: input, shape index: {}]
  %s1 = inlined_call_operand.<no memory space> [shape: s32[1], index: 1, kind: input, shape index: {}]
  %s2 = inlined_call_operand.vmem [shape: s32[8,1], index: 2, kind: input, shape index: {}]
  %s3 = inlined_call_operand.vmem [shape: s32[8,1], index: 3, kind: input, shape index: {}]
  %s4 = inlined_call_operand.vmem [shape: f32[8,32], index: 4, kind: input, shape index: {}]
  %s5 = inlined_call_operand.vmem [shape: f32[32,32], index: 5, kind: input, shape index: {}]
  %s6 = inlined_call_operand.vmem [shape: f32[1,32], index: 6, kind: input, shape index: {}]
  %s7 = inlined_call_operand.hbm [shape: f32[32,32], index: 7, kind: input, shape index: {}]
  %s8 = inlined_call_operand.vmem [shape: f32[1,32], index: 8, kind: input, shape index: {}]
  %s9 = inlined_call_operand.vmem [shape: f32[1,32], index: 9, kind: input, shape index: {}]
  %s10 = inlined_call_operand.<no memory space> [shape: f32[1,1], index: 10, kind: input, shape index: {}]
  %s11 = inlined_call_operand.vmem [shape: f32[8,1], index: 11, kind: output, shape index: {}]
  %s12 = sld [smem:[#allocation0]]
  $region62: #{tpu_custom_call.1} parent=0
    _
  %s14 = ssub.s32 1, %s12
  %s15 = scalar_select 0, %s14, %s12
  %16 = sst [smem:[#allocation4]] %s0
  %17 = sst [smem:[#allocation5]] %s1
  %v18 = vstv %s10
  %19 = vst [vmem:[#allocation6] sm:$0x1] %v18
  $region1: #{tpu_custom_call.1} parent=0
    #allocation7 [shape = 'u8[16384]{0}', space=vmem, size = 0x4000, scoped, tag = 'input window, operand 7, single buffered']
    #allocation8 [shape = 's32[1]{0}', space=sflag, size = 0x4, scoped, tag = 'scoped memory for tpu_custom_call.1']
    %20 = vsyncpa [#allocation8], 0
    // Predicated region
    $region2: #{tpu_custom_call.1} parent=1 // pred_check
      _
    $region3: #{tpu_custom_call.1} parent=1 // pred_check_branch
      %22 = sbr.rel (0) target = $region5
    $region4: #{tpu_custom_call.1} parent=1 // pred_region
      _
    $region5: #{tpu_custom_call.1} parent=1 // pred_fallthru
      _
    // Predicated region
    $region6: #{tpu_custom_call.1} parent=1 // pred_check
      _
    $region7: #{tpu_custom_call.1} parent=1 // pred_check_branch
      %24 = sbr.rel (0) target = $region9
    $region8: #{tpu_custom_call.1} parent=1 // pred_region
      _
    $region9: #{tpu_custom_call.1} parent=1 // pred_fallthru
      _
    // Predicated region
    $region10: #{tpu_custom_call.1} parent=1 // pred_check
      _
    $region11: #{tpu_custom_call.1} parent=1 // pred_check_branch
      %26 = sbr.rel (0) target = $region13
    $region12: #{tpu_custom_call.1} parent=1 // pred_region
      %s27 = sld [smem:[#allocation4]]
      %s28 = sadd.s32 %s27, 0
      %p29 = scmp.lt.s32.totalorder %s28, 0
      %s30 = scalar_select %p29, %s28, 0
      %p31 = scmp.lt.s32.totalorder %s30, 0
      %s32 = scalar_select %p31, %s30, 0
      %s33 = smul.addr %s32, 8
      %s34 = scalar_lea.vmem %s4, %s33
      %s35 = sld [smem:[#allocation4]]
      %s36 = sadd.s32 %s35, 0
      %p37 = scmp.lt.s32.totalorder %s36, 0
      %s38 = scalar_select %p37, %s36, 0
    $region13: #{tpu_custom_call.1} parent=1 // pred_fallthru
      _
    // Predicated region
    $region14: #{tpu_custom_call.1} parent=1 // pred_check
      _
    $region15: #{tpu_custom_call.1} parent=1 // pred_check_branch
      %40 = sbr.rel (0) target = $region17
    $region16: #{tpu_custom_call.1} parent=1 // pred_region
      _
    $region17: #{tpu_custom_call.1} parent=1 // pred_fallthru
      _
    // Predicated region
    $region18: #{tpu_custom_call.1} parent=1 // pred_check
      _
    $region19: #{tpu_custom_call.1} parent=1 // pred_check_branch
      %42 = sbr.rel (0) target = $region21
    $region20: #{tpu_custom_call.1} parent=1 // pred_region
      _
    $region21: #{tpu_custom_call.1} parent=1 // pred_fallthru
      _
    // Predicated region
    $region22: #{tpu_custom_call.1} parent=1 // pred_check
      _
    $region23: #{tpu_custom_call.1} parent=1 // pred_check_branch
      %44 = sbr.rel (0) target = $region25
    $region24: #{tpu_custom_call.1} parent=1 // pred_region
      %s46 = ssub.s32 512, 512
      %47 = vsyncadd [#allocation8], %s46
      %s48 = sshll.u32 [#allocation7], 4
      %s49 = int_to_ptr.vmem [resolvable:$true] %s48
      %54 = dma.hbm_to_vmem [thread:$0]  %s7, 512, %s49, [#allocation8], 128, 128, 8
    $region25: #{tpu_custom_call.1} parent=1 // pred_fallthru
      _
    // Predicated region
    $region26: #{tpu_custom_call.1} parent=1 // pred_check
      _
    $region27: #{tpu_custom_call.1} parent=1 // pred_check_branch
      %56 = sbr.rel (0) target = $region29
    $region28: #{tpu_custom_call.1} parent=1 // pred_region
      _
    $region29: #{tpu_custom_call.1} parent=1 // pred_fallthru
      _
    // Predicated region
    $region30: #{tpu_custom_call.1} parent=1 // pred_check
      _
    $region31: #{tpu_custom_call.1} parent=1 // pred_check_branch
      %58 = sbr.rel (0) target = $region33
    $region32: #{tpu_custom_call.1} parent=1 // pred_region
      _
    $region33: #{tpu_custom_call.1} parent=1 // pred_fallthru
      _
    // Predicated region
    $region34: #{tpu_custom_call.1} parent=1 // pred_check
      _
    $region35: #{tpu_custom_call.1} parent=1 // pred_check_branch
      %60 = sbr.rel (0) target = $region37
    $region36: #{tpu_custom_call.1} parent=1 // pred_region
      _
    $region37: #{tpu_custom_call.1} parent=1 // pred_fallthru
      _
    // Predicated region
    $region38: #{tpu_custom_call.1} parent=1 // pred_check
      _
    $region39: #{tpu_custom_call.1} parent=1 // pred_check_branch
      %62 = sbr.rel (0) target = $region41
    $region40: #{tpu_custom_call.1} parent=1 // pred_region
      %63 = dma.done [#allocation8], 512
    $region41: #{tpu_custom_call.1} parent=1 // pred_fallthru
      _
    %s64 = sld [smem:[#allocation4]]
    %s65 = sadd.s32 %s64, 0
    %p66 = scmp.lt.s32.totalorder %s65, 0
    %s67 = scalar_select %p66, %s65, 0
    %p68 = scmp.lt.s32.totalorder %s67, 0
    %s69 = scalar_select %p68, %s67, 0
    %s70 = smul.addr %s69, 8
    %s71 = scalar_lea.vmem %s4, %s70
    %s72 = sld [smem:[#allocation4]]
    %s73 = sadd.s32 %s72, 0
    %p74 = scmp.lt.s32.totalorder %s73, 0
    %s75 = scalar_select %p74, %s73, 0
    %p76 = scmp.lt.s32.totalorder %s75, 0
    %s77 = scalar_select %p76, %s75, 0
    %s78 = smul.addr %s77, 8
    %s79 = scalar_lea.vmem %s4, %s78
    %s80 = sld [smem:[#allocation4]]
    %s81 = sadd.s32 %s80, 0
    %p82 = scmp.lt.s32.totalorder %s81, 0
    %s83 = scalar_select %p82, %s81, 0
    %p84 = scmp.eq.s32.totalorder 0, 0
    // Predicated region
    $region42: #{tpu_custom_call.1} parent=1 // pred_check
      %p85 = pneg %p84
    $region43: #{tpu_custom_call.1} parent=1 // pred_check_branch
      %87 = sbr.rel (%p85) target = $region45
    $region44: #{tpu_custom_call.1} parent=1 // pred_region
      %vm88 = vcmask 261120
      %89 = vst.msk [vmem:[#allocation2] sm:$0xff] %vm88, 0.0
    $region45: #{tpu_custom_call.1} parent=1 // pred_fallthru
      _
    %s90 = sld [smem:[#allocation5]]
    %p91 = scmp.lt.s32.totalorder 0, %s90
    // Predicated region
    $region46: #{tpu_custom_call.1} parent=1 // pred_check
      %p92 = pneg %p91
    $region47: #{tpu_custom_call.1} parent=1 // pred_check_branch
      %94 = sbr.rel (%p92) target = $region49
    $region48: #{tpu_custom_call.1} parent=1 // pred_region
      %s95 = sld [smem:[#allocation4]]
      %s96 = sadd.s32 %s95, 0
      %s97 = smul.u32 %s96, 8
      %v98 = vlaneseq
      %v99 = vand.u32 %v98, 127
      %v100 = vld [vmem:[%s2] sm:$0xff]
      %v101 = vstv %s97
      %v102 = vsub.s32 %v100, %v101
      %v103 = vld [vmem:[%s3] sm:$0xff]
      %v104 = vadd.s32 %v102, %v103
      %105 = vset.pattern.permute.xlu0 0
      %106 = vperm.xlu0 %105, %v102
      %v107 = vpop.permute.xlu0 %106
      %vm108 = vcmp.ge.s32.totalorder %v99, %v107
      %109 = vset.pattern.permute.xlu0 0
      %110 = vperm.xlu0 %109, %v104
      %v111 = vpop.permute.xlu0 %110
      %vm112 = vcmp.lt.s32.totalorder %v99, %v111
      %vm113 = vmand %vm108, %vm112
      %v114 = vld [vmem:[%s79] sm:$0xff]
      %v115 = vsel %vm113, 1, 0
      %v116 = vcvt.s32.f32 %v115
      %v117 = vld [vmem:[#allocation2] sm:$0xff]
      %vm118 = vcmask 64512
      %v120 = vsel %vm118, %v116, 0
      %122 = vmatprep.subr.mxu0 0.0
      %123 = vmatpush1.msra.mxu0 %v114
      %124 = vmatprep.subr.mxu0 0.0
      %125 = vmatpush1.msra.mxu0 0.0
      %126 = vmatprep.subr.mxu0 0.0
      %127 = vmatpush1.msra.mxu0 0.0
      %128 = vmatprep.subr.mxu0 0.0
      %129 = vmatpush1.msra.mxu0 0.0
      %130 = vmatprep.subr.mxu0 0.0
      %131 = vmatpush1.msra.mxu0 0.0
      %132 = vmatprep.subr.mxu0 0.0
      %133 = vmatpush1.msra.mxu0 0.0
      %134 = vmatprep.subr.mxu0 0.0
      %135 = vmatpush1.msra.mxu0 0.0
      %136 = vmatprep.subr.mxu0 0.0
      %137 = vmatpush1.msra.mxu0 0.0
      %138 = vmatprep.subr.mxu0 0.0
      %139 = vmatpush1.msra.mxu0 0.0
      %140 = vmatprep.subr.mxu0 0.0
      %141 = vmatpush1.msra.mxu0 0.0
      %142 = vmatprep.subr.mxu0 0.0
      %143 = vmatpush1.msra.mxu0 0.0
      %144 = vmatprep.subr.mxu0 0.0
      %145 = vmatpush1.msra.mxu0 0.0
      %146 = vmatprep.subr.mxu0 0.0
      %147 = vmatpush1.msra.mxu0 0.0
      %148 = vmatprep.subr.mxu0 0.0
      %149 = vmatpush1.msra.mxu0 0.0
      %150 = vmatprep.subr.mxu0 0.0
      %151 = vmatpush1.msra.mxu0 0.0
      %152 = vmatprep.subr.mxu0 0.0
      %153 = vmatpush1.msra.mxu0 0.0
      %154 = vmatprep.subr.mxu0 0.0
      %155 = vmatpush1.msra.mxu0 0.0
      %156 = vmatprep.subr.mxu0 0.0
      %157 = vmatpush1.msra.mxu0 0.0
      %158 = vmatprep.subr.mxu0 0.0
      %159 = vmatpush1.msra.mxu0 0.0
      %160 = vmatprep.subr.mxu0 0.0
      %161 = vmatpush1.msra.mxu0 0.0
      %162 = vmatprep.subr.mxu0 0.0
      %163 = vmatpush1.msra.mxu0 0.0
      %164 = vmatprep.subr.mxu0 0.0
      %165 = vmatpush1.msra.mxu0 0.0
      %166 = vmatprep.subr.mxu0 0.0
      %167 = vmatpush1.msra.mxu0 0.0
      %168 = vmatprep.subr.mxu0 0.0
      %169 = vmatpush1.msra.mxu0 0.0
      %170 = vmatprep.subr.mxu0 0.0
      %171 = vmatpush1.msra.mxu0 0.0
      %172 = vmatprep.subr.mxu0 0.0
      %173 = vmatpush1.msra.mxu0 0.0
      %174 = vmatprep.subr.mxu0 0.0
      %175 = vmatpush1.msra.mxu0 0.0
      %176 = vmatprep.subr.mxu0 0.0
      %177 = vmatpush1.msra.mxu0 0.0
      %178 = vmatprep.subr.mxu0 0.0
      %179 = vmatpush1.msra.mxu0 0.0
      %180 = vmatprep.subr.mxu0 0.0
      %181 = vmatpush1.msra.mxu0 0.0
      %182 = vmatprep.subr.mxu0 0.0
      %183 = vmatpush1.msra.mxu0 0.0
      %184 = vmatprep.subr.mxu0 0.0
      %185 = vmatpush1.msra.mxu0 0.0
      %186 = vmatprep.mubr.f32.mxu0 0.0
      %187 = vmatmul.mubr.f32.gmra.mrb[0].mxu0 %v120
      %v188 = vpop.f32.mrb[0].mxu0
      %v189 = vadd.f32 0.0, %v188
      %v190 = vpop.f32.mrb[0].mxu0
      %191 = vdwg.mxu0
      %v192 = vadd.f32 %v117, %v189
      %vm193 = vcmask 261120
      %194 = vst.msk [vmem:[#allocation2] sm:$0xff] %vm193, %v192
    $region49: #{tpu_custom_call.1} parent=1 // pred_fallthru
      _
    // Predicated region
    $region50: #{tpu_custom_call.1} parent=1 // pred_check
      %p195 = pneg %p84
    $region51: #{tpu_custom_call.1} parent=1 // pred_check_branch
      %197 = sbr.rel (%p195) target = $region53
    $region52: #{tpu_custom_call.1} parent=1 // pred_region
      %v198 = vld [vmem:[%s3] sm:$0xff]
      %vm199 = vcmp.gt.s32.totalorder %v198, 1
      %v200 = vsel %vm199, %v198, 1
      %v201 = vcvt.s32.f32 %v200
      %v202 = vrcp.pop %v201
      %v203 = vld [vmem:[#allocation2] sm:$0xff]
      %205 = vset.pattern.permute.xlu0 0
      %206 = vperm.xlu0 %205, %v202
      %v207 = vpop.permute.xlu0 %206
      %v209 = vmul.f32 %v203, %v207
      %v210 = vld [vmem:[%s5] sm:$0xff]
      %v211 = vld [vmem:[%s5 + $0x8] sm:$0xff]
      %v212 = vld [vmem:[%s5 + $0x10] sm:$0xff]
      %v213 = vld [vmem:[%s5 + $0x18] sm:$0xff]
      %v214 = vld [vmem:[%s6] sm:$0x1]
      %v216 = vlaneseq
      %v217 = vshrl.u32 %v216, 7
      %v218 = vsub.s32 0, %v217
      %v219 = vrot.slane %v214, %v218
      %vm221 = vcmask 261120
      %v223 = vsel %vm221, %v209, 0
      %225 = vmatprep.subr.mxu0 0.0
      %226 = vmatpush1.msra.mxu0 %v210
      %227 = vmatprep.subr.mxu0 0.0
      %228 = vmatpush1.msra.mxu0 %v211
      %229 = vmatprep.subr.mxu0 0.0
      %230 = vmatpush1.msra.mxu0 %v212
      %231 = vmatprep.subr.mxu0 0.0
      %232 = vmatpush1.msra.mxu0 %v213
      %233 = vmatprep.subr.mxu0 0.0
      %234 = vmatpush1.msra.mxu0 0.0
      %235 = vmatprep.subr.mxu0 0.0
      %236 = vmatpush1.msra.mxu0 0.0
      %237 = vmatprep.subr.mxu0 0.0
      %238 = vmatpush1.msra.mxu0 0.0
      %239 = vmatprep.subr.mxu0 0.0
      %240 = vmatpush1.msra.mxu0 0.0
      %241 = vmatprep.subr.mxu0 0.0
      %242 = vmatpush1.msra.mxu0 0.0
      %243 = vmatprep.subr.mxu0 0.0
      %244 = vmatpush1.msra.mxu0 0.0
      %245 = vmatprep.subr.mxu0 0.0
      %246 = vmatpush1.msra.mxu0 0.0
      %247 = vmatprep.subr.mxu0 0.0
      %248 = vmatpush1.msra.mxu0 0.0
      %249 = vmatprep.subr.mxu0 0.0
      %250 = vmatpush1.msra.mxu0 0.0
      %251 = vmatprep.subr.mxu0 0.0
      %252 = vmatpush1.msra.mxu0 0.0
      %253 = vmatprep.subr.mxu0 0.0
      %254 = vmatpush1.msra.mxu0 0.0
      %255 = vmatprep.subr.mxu0 0.0
      %256 = vmatpush1.msra.mxu0 0.0
      %257 = vmatprep.subr.mxu0 0.0
      %258 = vmatpush1.msra.mxu0 0.0
      %259 = vmatprep.subr.mxu0 0.0
      %260 = vmatpush1.msra.mxu0 0.0
      %261 = vmatprep.subr.mxu0 0.0
      %262 = vmatpush1.msra.mxu0 0.0
      %263 = vmatprep.subr.mxu0 0.0
      %264 = vmatpush1.msra.mxu0 0.0
      %265 = vmatprep.subr.mxu0 0.0
      %266 = vmatpush1.msra.mxu0 0.0
      %267 = vmatprep.subr.mxu0 0.0
      %268 = vmatpush1.msra.mxu0 0.0
      %269 = vmatprep.subr.mxu0 0.0
      %270 = vmatpush1.msra.mxu0 0.0
      %271 = vmatprep.subr.mxu0 0.0
      %272 = vmatpush1.msra.mxu0 0.0
      %273 = vmatprep.subr.mxu0 0.0
      %274 = vmatpush1.msra.mxu0 0.0
      %275 = vmatprep.subr.mxu0 0.0
      %276 = vmatpush1.msra.mxu0 0.0
      %277 = vmatprep.subr.mxu0 0.0
      %278 = vmatpush1.msra.mxu0 0.0
      %279 = vmatprep.subr.mxu0 0.0
      %280 = vmatpush1.msra.mxu0 0.0
      %281 = vmatprep.subr.mxu0 0.0
      %282 = vmatpush1.msra.mxu0 0.0
      %283 = vmatprep.subr.mxu0 0.0
      %284 = vmatpush1.msra.mxu0 0.0
      %285 = vmatprep.subr.mxu0 0.0
      %286 = vmatpush1.msra.mxu0 0.0
      %287 = vmatprep.subr.mxu0 0.0
      %288 = vmatpush1.msra.mxu0 0.0
      %289 = vmatprep.mubr.f32.mxu0 0.0
      %290 = vmatmul.mubr.f32.gmra.mrb[0].mxu0 %v223
      %v291 = vpop.f32.mrb[0].mxu0
      %v292 = vadd.f32 %v219, %v291
      %v293 = vpop.f32.mrb[0].mxu0
      %294 = vdwg.mxu0
      %v295 = vmax.f32 %v292, 0.0
      %vm296 = vcmp.ne.f32.partialorder %v292, %v292
      %v297 = vadd.f32 %v292, 0.0
      %v298 = vand.u32 2147483647, %v292
      %v299 = vsub.f32 0.0, %v298
      %v300 = vmul.f32 %v299, 1.442695
      %v301 = vpow.pop %v300
      %v302 = vadd.f32 %v301, 1.0
      %v303 = vlog2.pop %v302
      %v304 = vmul.f32 %v303, 0.6931472
      %v305 = vmul.f32 -0.5, %v301
      %v306 = vadd.f32 %v305, 1.0
      %v307 = vmul.f32 %v306, %v301
      %v308 = vand.u32 2147483647, %v301
      %vm309 = vcmp.lt.f32.partialorder %v308, 0.0004427343
      %v310 = vsel %vm309, %v307, %v304
      %v311 = vadd.f32 %v295, %v310
      %v312 = vsel %vm296, %v297, %v311
      %v313 = vsub.f32 %v312, 0.6931472
      %v314 = vld [vmem:[#allocation7] sm:$0xff]
      %v315 = vld [vmem:[#allocation7 + $0x8] sm:$0xff]
      %v316 = vld [vmem:[#allocation7 + $0x10] sm:$0xff]
      %v317 = vld [vmem:[#allocation7 + $0x18] sm:$0xff]
      %v318 = vld [vmem:[%s8] sm:$0x1]
      %v320 = vlaneseq
      %v321 = vshrl.u32 %v320, 7
      %v322 = vsub.s32 0, %v321
      %v323 = vrot.slane %v318, %v322
      %v326 = vsel %vm221, %v313, 0
      %328 = vmatprep.subr.mxu0 0.0
      %329 = vmatpush1.msra.mxu0 %v314
      %330 = vmatprep.subr.mxu0 0.0
      %331 = vmatpush1.msra.mxu0 %v315
      %332 = vmatprep.subr.mxu0 0.0
      %333 = vmatpush1.msra.mxu0 %v316
      %334 = vmatprep.subr.mxu0 0.0
      %335 = vmatpush1.msra.mxu0 %v317
      %336 = vmatprep.subr.mxu0 0.0
      %337 = vmatpush1.msra.mxu0 0.0
      %338 = vmatprep.subr.mxu0 0.0
      %339 = vmatpush1.msra.mxu0 0.0
      %340 = vmatprep.subr.mxu0 0.0
      %341 = vmatpush1.msra.mxu0 0.0
      %342 = vmatprep.subr.mxu0 0.0
      %343 = vmatpush1.msra.mxu0 0.0
      %344 = vmatprep.subr.mxu0 0.0
      %345 = vmatpush1.msra.mxu0 0.0
      %346 = vmatprep.subr.mxu0 0.0
      %347 = vmatpush1.msra.mxu0 0.0
      %348 = vmatprep.subr.mxu0 0.0
      %349 = vmatpush1.msra.mxu0 0.0
      %350 = vmatprep.subr.mxu0 0.0
      %351 = vmatpush1.msra.mxu0 0.0
      %352 = vmatprep.subr.mxu0 0.0
      %353 = vmatpush1.msra.mxu0 0.0
      %354 = vmatprep.subr.mxu0 0.0
      %355 = vmatpush1.msra.mxu0 0.0
      %356 = vmatprep.subr.mxu0 0.0
      %357 = vmatpush1.msra.mxu0 0.0
      %358 = vmatprep.subr.mxu0 0.0
      %359 = vmatpush1.msra.mxu0 0.0
      %360 = vmatprep.subr.mxu0 0.0
      %361 = vmatpush1.msra.mxu0 0.0
      %362 = vmatprep.subr.mxu0 0.0
      %363 = vmatpush1.msra.mxu0 0.0
      %364 = vmatprep.subr.mxu0 0.0
      %365 = vmatpush1.msra.mxu0 0.0
      %366 = vmatprep.subr.mxu0 0.0
      %367 = vmatpush1.msra.mxu0 0.0
      %368 = vmatprep.subr.mxu0 0.0
      %369 = vmatpush1.msra.mxu0 0.0
      %370 = vmatprep.subr.mxu0 0.0
      %371 = vmatpush1.msra.mxu0 0.0
      %372 = vmatprep.subr.mxu0 0.0
      %373 = vmatpush1.msra.mxu0 0.0
      %374 = vmatprep.subr.mxu0 0.0
      %375 = vmatpush1.msra.mxu0 0.0
      %376 = vmatprep.subr.mxu0 0.0
      %377 = vmatpush1.msra.mxu0 0.0
      %378 = vmatprep.subr.mxu0 0.0
      %379 = vmatpush1.msra.mxu0 0.0
      %380 = vmatprep.subr.mxu0 0.0
      %381 = vmatpush1.msra.mxu0 0.0
      %382 = vmatprep.subr.mxu0 0.0
      %383 = vmatpush1.msra.mxu0 0.0
      %384 = vmatprep.subr.mxu0 0.0
      %385 = vmatpush1.msra.mxu0 0.0
      %386 = vmatprep.subr.mxu0 0.0
      %387 = vmatpush1.msra.mxu0 0.0
      %388 = vmatprep.subr.mxu0 0.0
      %389 = vmatpush1.msra.mxu0 0.0
      %390 = vmatprep.subr.mxu0 0.0
      %391 = vmatpush1.msra.mxu0 0.0
      %392 = vmatprep.mubr.f32.mxu0 0.0
      %393 = vmatmul.mubr.f32.gmra.mrb[0].mxu0 %v326
      %v394 = vpop.f32.mrb[0].mxu0
      %v395 = vadd.f32 %v323, %v394
      %v396 = vpop.f32.mrb[0].mxu0
      %397 = vdwg.mxu0
      %v398 = vmax.f32 %v395, 0.0
      %vm399 = vcmp.ne.f32.partialorder %v395, %v395
      %v400 = vadd.f32 %v395, 0.0
      %v401 = vand.u32 2147483647, %v395
      %v402 = vsub.f32 0.0, %v401
      %v403 = vmul.f32 %v402, 1.442695
      %v404 = vpow.pop %v403
      %v405 = vadd.f32 %v404, 1.0
      %v406 = vlog2.pop %v405
      %v407 = vmul.f32 %v406, 0.6931472
      %v408 = vmul.f32 -0.5, %v404
      %v409 = vadd.f32 %v408, 1.0
      %v410 = vmul.f32 %v409, %v404
      %v411 = vand.u32 2147483647, %v404
      %vm412 = vcmp.lt.f32.partialorder %v411, 0.0004427343
      %v413 = vsel %vm412, %v410, %v407
      %v414 = vadd.f32 %v398, %v413
      %v415 = vsel %vm399, %v400, %v414
      %v416 = vsub.f32 %v415, 0.6931472
      %v417 = vld [vmem:[%s9] sm:$0x1]
      %v418 = vld [vmem:[#allocation6] sm:$0x1]
      %v420 = vlaneseq
      %v421 = vshrl.u32 %v420, 7
      %v422 = vsub.s32 0, %v421
      %v423 = vrot.slane %v417, %v422
      %v425 = vmul.f32 %v416, %v423
      %v426 = vsel %vm221, %v425, 0.0
      %427 = vadd.xlane.f32.xlu0 %v426
      %v428 = vpop.xlane.xlu0 %427
      %v430 = vlaneseq
      %v431 = vshrl.u32 %v430, 7
      %v432 = vsub.s32 0, %v431
      %v433 = vrot.slane %v418, %v432
      %v435 = vadd.f32 %v428, %v433
      %vm436 = vcmask 7168
      %437 = vst.msk [vmem:[%s11] sm:$0xff] %vm436, %v435
    $region53: #{tpu_custom_call.1} parent=1 // pred_fallthru
      _
    // Predicated region
    $region54: #{tpu_custom_call.1} parent=1 // pred_check
      _
    $region55: #{tpu_custom_call.1} parent=1 // pred_check_branch
      %439 = sbr.rel (0) target = $region57
    $region56: #{tpu_custom_call.1} parent=1 // pred_region
      _
    $region57: #{tpu_custom_call.1} parent=1 // pred_fallthru
      _
    // Predicated region
    $region58: #{tpu_custom_call.1} parent=1 // pred_check
      _
    $region59: #{tpu_custom_call.1} parent=1 // pred_check_branch
      %441 = sbr.rel (0) target = $region61
    $region60: #{tpu_custom_call.1} parent=1 // pred_region
      _
    $region61: #{tpu_custom_call.1} parent=1 // pred_fallthru
      _
    %442 = vsyncpa [#allocation8], 1

</llo_original>
